<compile_context>
chip_gen: v5e
topology: v5e:2x2
jax: 0.10.0
libtpu: 0.0.40
codegen_flags: <defaults>
</compile_context>

<pallas_src>
import math
from functools import partial

import jax
import jax.numpy as jnp
from jax import lax
from jax.experimental import pallas as pl
from jax.experimental.pallas import tpu as pltpu

_LANE = 128


def _round_up(v, m):
    return (v + m - 1) // m * m


def _pad2(a, rows, cols):
    r, c = a.shape
    return jnp.pad(a, ((0, rows - r), (0, cols - c)))


def _vmem_budget_bytes():
    """Per-generation VMEM request budget, conservative w.r.t. physical capacity."""
    try:
        kind = jax.devices()[0].device_kind.lower()
    except Exception:
        kind = ""
    if "v7" in kind:
        return 48 << 20          # v7x: 64 MiB per TC -> leave compiler-scratch headroom
    if ("v5" in kind) or ("v6" in kind):
        return 96 << 20          # v5e / v6e: 128 MiB physical VMEM
    return 48 << 20              # unknown chip: be safe


# ----------------------------------------------------------------------------- kernel
def _gcn_kernel(x_ref, adj_ref, wr_ref, br_ref, w0_ref, b0_ref, w1_ref, b1_ref,
                o_ref, *, reorder_conv0, unroll):
    """One batch block per grid step; per batch element (bf16 MXU, fp32 accumulation):

        conv0:  h  = relu(adj @ (x @ W0') + b0')        (BatchNorm folded into W0'/b0')
                 re-associated to (adj @ x) @ W0' when padded nfeat <= nhid
        conv1:  o  = adj @ (h @ W1) + b1 + (x @ Wr + br)

    Dropout is identity in eval mode.
    """
    bb = x_ref.shape[0]
    adj = adj_ref[...]                 # (Np, Np) bf16, grid-invariant
    wr = wr_ref[...]
    w0 = w0_ref[...]
    w1 = w1_ref[...]
    br = br_ref[...]
    b0 = b0_ref[...]
    b1 = b1_ref[...]

    def body(bi, carry):
        xb = x_ref[bi]                                                   # (Np, Fp) bf16
        if reorder_conv0:
            ax = jnp.dot(adj, xb,
                         preferred_element_type=jnp.float32).astype(jnp.bfloat16)
            h = jnp.dot(ax, w0, preferred_element_type=jnp.float32) + b0
        else:
            s = jnp.dot(xb, w0,
                        preferred_element_type=jnp.float32).astype(jnp.bfloat16)
            h = jnp.dot(adj, s, preferred_element_type=jnp.float32) + b0
        # ReLU in fp32 on the VPU.  TODO(synk): train-mode dropout RNG not reproduced.
        h = jnp.maximum(h, 0.0).astype(jnp.bfloat16)
        s1 = jnp.dot(h, w1, preferred_element_type=jnp.float32).astype(jnp.bfloat16)
        # Residual computed per batch element right before the add (small live range).
        res = jnp.dot(xb, wr, preferred_element_type=jnp.float32) + br
        o_ref[bi] = jnp.dot(adj, s1, preferred_element_type=jnp.float32) + b1 + res
        return carry

    if unroll:
        for bi in range(bb):           # small block: fully static unroll
            body(bi, None)
    else:
        lax.fori_loop(0, bb, body, None)   # large block: bound live ranges


# ------------------------------------------------------------------- host-side prep
def prepare_gcn(adj, raw_params):
    """One-time host-side fold / pad / cast of the module parameters."""
    (wr, br, w0, b0, gamma, beta, r_mean, r_var, w1, b1) = raw_params
    nfeat, nhid = w0.shape
    nout = w1.shape[1]
    assert nhid == nout, "residual add requires nhid == nout (as in the torch module)"
    eps = 1e-5

    # Fold BatchNorm1d (eval mode, running stats) into GraphConvolution-0 weight/bias.
    scale = gamma / jnp.sqrt(r_var + eps)
    w0f = w0 * scale[None, :]
    b0f = (b0 - r_mean) * scale + beta

    fp = _round_up(nfeat, _LANE)       # feature dim 128-padded (contraction dim of x GEMMs)
    hp = _round_up(nhid, _LANE)
    op = _round_up(nout, _LANE)
    n = adj.shape[0]
    n_p = _round_up(n, _LANE)          # node dim 128-padded (contraction dim of adj GEMMs)

    arrs = {
        "adj_bf16": _pad2(adj, n_p, n_p).astype(jnp.bfloat16),
        "wr": _pad2(wr, fp, hp).astype(jnp.bfloat16),
        "br": _pad2(br.reshape(1, -1), 1, hp).astype(jnp.float32),
        "w0": _pad2(w0f, fp, hp).astype(jnp.bfloat16),
        "b0": _pad2(b0f.reshape(1, -1), 1, hp).astype(jnp.float32),
        "w1": _pad2(w1, hp, op).astype(jnp.bfloat16),
        "b1": _pad2(b1.reshape(1, -1), 1, op).astype(jnp.float32),
    }
    meta = {"nhid": int(nhid), "nout": int(nout)}
    return arrs, meta


def make_gcn_forward(nhid, nout):
    def forward(x, adj, arrs):
        """x: (B, N, nfeat) f32.  Returns (out (B, N, nout) f32, adj)."""
        b, n, nfeat = x.shape
        adj_b = arrs["adj_bf16"]
        n_p = adj_b.shape[0]
        fp, hp = arrs["wr"].shape
        op = arrs["w1"].shape[1]
        reorder = fp <= hp

        budget = _vmem_budget_bytes()
        # Grid-invariant blocks (double-buffered by the Pallas pipeline).
        fixed = 2 * (n_p * n_p * 2 + 2 * fp * hp * 2 + hp * op * 2 + (2 * hp + op) * 4)

        def est(bb):
            io = 2 * (bb * n_p * fp * 2 + bb * n_p * op * 4)   # x / out blocks, 2x buffers
            inter = n_p * (6 * fp + 10 * hp + 10 * op)          # per-element live temporaries
            return fixed + io + inter

        # Batch blocking from the VMEM budget; >= 2 grid steps when possible so the
        # pipeline overlaps DMA with compute and both v7x TensorCores are engaged.
        # TODO(synk): for B == 1 on v7x a node-dim split would engage the second TC.
        divisors = [d for d in range(1, b + 1) if b % d == 0]
        min_steps = 2 if b >= 2 else 1
        fit = [d for d in divisors if est(d) <= int(0.85 * budget)]
        cand = [d for d in fit if b // d >= min_steps]
        bb = max(cand) if cand else (max(fit) if fit else 1)
        nblk = b // bb

        # Pad node/feature dims and cast activations to bf16 once (halves x DMA bytes).
        xp = x
        if n_p != n or fp != nfeat:
            xp = jnp.pad(x, ((0, 0), (0, n_p - n), (0, fp - nfeat)))
        xp = xp.astype(jnp.bfloat16)

        def inv(shape):  # grid-invariant block
            return pl.BlockSpec(shape, lambda *args: (0,) * len(shape))

        out_padded = pl.pallas_call(
            partial(_gcn_kernel, reorder_conv0=reorder, unroll=(bb <= 4)),
            out_shape=jax.ShapeDtypeStruct((b, n_p, op), jnp.float32),
            grid_spec=pltpu.PrefetchScalarGridSpec(
                num_scalar_prefetch=0,
                grid=(nblk,),
                in_specs=[
                    pl.BlockSpec((bb, n_p, fp), lambda i: (i, 0, 0)),  # x batch block (bf16)
                    inv((n_p, n_p)),                                   # adj (bf16)
                    inv((fp, hp)),                                     # Wr
                    inv((1, hp)),                                      # br
                    inv((fp, hp)),                                     # W0' (BN folded)
                    inv((1, hp)),                                      # b0'
                    inv((hp, op)),                                     # W1
                    inv((1, op)),                                      # b1
                ],
                out_specs=pl.BlockSpec((bb, n_p, op), lambda i: (i, 0, 0)),
            ),
            compiler_params=pltpu.CompilerParams(
                dimension_semantics=("parallel",),
                vmem_limit_bytes=int(budget)),
        )(xp, adj_b, arrs["wr"], arrs["br"], arrs["w0"], arrs["b0"],
          arrs["w1"], arrs["b1"])

        out = out_padded[:, :n, :nout]
        return out, adj

    return forward


# --------------------------------------------------------------------------- helpers
def init_params(key, nfeat, nhid, nout):
    """Deterministic parameter init (mimics kaiming/linear uniform bounds) + BN stats."""
    ks = jax.random.split(key, 8)

    def uni(k, shape, fan_in):
        bound = 1.0 / math.sqrt(fan_in)
        return jax.random.uniform(k, shape, jnp.float32, -bound, bound)

    wr = uni(ks[0], (nfeat, nhid), nfeat)
    br = uni(ks[1], (nhid,), nfeat)
    w0 = uni(ks[2], (nfeat, nhid), nfeat)
    b0 = uni(ks[3], (nhid,), nfeat)
    gamma = jnp.ones((nhid,), jnp.float32)
    beta = jnp.zeros((nhid,), jnp.float32)
    running_mean = 0.1 * jax.random.normal(ks[6], (nhid,), jnp.float32)
    running_var = 1.0 + 0.2 * jax.random.uniform(ks[7], (nhid,), jnp.float32)
    w1 = uni(ks[4], (nhid, nout), nhid)
    b1 = uni(ks[5], (nout,), nhid)
    return (wr, br, w0, b0, gamma, beta, running_mean, running_var, w1, b1)


def make_adj(n):
    """Deterministic row-normalized adjacency (ring graph + self loops),
    standing in for the np.load(mat_path) buffer."""
    eye = jnp.eye(n, dtype=jnp.float32)
    ring = jnp.roll(eye, 1, axis=1) + jnp.roll(eye, -1, axis=1)
    a = eye + ring
    return a / jnp.sum(a, axis=1, keepdims=True)


def gcn_reference(x, adj, raw_params):
    """Pure-JAX fp32 reference of the PyTorch module's forward (eval mode)."""
    wr, br, w0, b0, gamma, beta, r_mean, r_var, w1, b1 = raw_params
    residual = x @ wr + br
    h = jnp.einsum('mn,bnh->bmh', adj, x @ w0) + b0
    h = (h - r_mean) / jnp.sqrt(r_var + 1e-5) * gamma + beta
    h = jnp.maximum(h, 0.0)
    h = jnp.einsum('mn,bno->bmo', adj, h @ w1) + b1
    return h + residual


if __name__ == "__main__":
    B, N = 2, 8                 # batch, graph nodes
    NFEAT, NHID, NOUT = 16, 32, 32

    key = jax.random.PRNGKey(0)
    kx, kp = jax.random.split(key)
    x = jax.random.normal(kx, (B, N, NFEAT), jnp.float32)
    raw_params = init_params(kp, NFEAT, NHID, NOUT)
    adj = make_adj(N)

    arrs, meta = prepare_gcn(adj, raw_params)            # one-time fold / pad / cast
    forward = jax.jit(make_gcn_forward(**meta))

    out, adj_out = forward(x, adj, arrs)
    jax.block_until_ready(out)
    jax.block_until_ready(adj_out)

    assert out.shape == (B, N, NOUT)
    assert adj_out.shape == (N, N)

    ref = gcn_reference(x, adj, raw_params)
    err = float(jnp.max(jnp.abs(out - ref)))
    assert err < 5e-2, f"max abs error vs fp32 reference: {err}"
    print("KERNEL_OK")
</pallas_src>

<mosaic_0001>
module attributes {stable_mosaic.version = 11 : i64} {
  func.func @_gcn_kernel(%arg0: i32, %arg1: memref<1x128x128xbf16, #tpu.memory_space<vmem>>, %arg2: memref<128x128xbf16, #tpu.memory_space<vmem>>, %arg3: memref<128x128xbf16, #tpu.memory_space<vmem>>, %arg4: memref<1x128xf32, #tpu.memory_space<vmem>>, %arg5: memref<128x128xbf16, #tpu.memory_space<vmem>>, %arg6: memref<1x128xf32, #tpu.memory_space<vmem>>, %arg7: memref<128x128xbf16, #tpu.memory_space<vmem>>, %arg8: memref<1x128xf32, #tpu.memory_space<vmem>>, %arg9: memref<1x128x128xf32, #tpu.memory_space<vmem>>) attributes {dimension_semantics = [#tpu.dimension_semantics<parallel>], iteration_bounds = array<i64: 2>, scalar_prefetch = 0 : i64, scratch_operands = 0 : i64, tpu.core_type = #tpu.core_type<tc>, window_params = [{transform_indices = @transform_0, window_bounds = array<i64: 1, 128, 128>}, {pipeline_mode = #tpu.pipeline_mode<synchronous>, transform_indices = @transform_1, window_bounds = array<i64: 128, 128>}, {pipeline_mode = #tpu.pipeline_mode<synchronous>, transform_indices = @transform_2, window_bounds = array<i64: 128, 128>}, {pipeline_mode = #tpu.pipeline_mode<synchronous>, transform_indices = @transform_3, window_bounds = array<i64: 1, 128>}, {pipeline_mode = #tpu.pipeline_mode<synchronous>, transform_indices = @transform_4, window_bounds = array<i64: 128, 128>}, {pipeline_mode = #tpu.pipeline_mode<synchronous>, transform_indices = @transform_5, window_bounds = array<i64: 1, 128>}, {pipeline_mode = #tpu.pipeline_mode<synchronous>, transform_indices = @transform_6, window_bounds = array<i64: 128, 128>}, {pipeline_mode = #tpu.pipeline_mode<synchronous>, transform_indices = @transform_7, window_bounds = array<i64: 1, 128>}, {transform_indices = @transform_8, window_bounds = array<i64: 1, 128, 128>}]} {
    %c0 = arith.constant 0 : index
    %c0_0 = arith.constant 0 : index
    %0 = vector.load %arg2[%c0, %c0_0] : memref<128x128xbf16, #tpu.memory_space<vmem>>, vector<128x128xbf16>
    %c0_1 = arith.constant 0 : index
    %c0_2 = arith.constant 0 : index
    %1 = vector.load %arg3[%c0_1, %c0_2] : memref<128x128xbf16, #tpu.memory_space<vmem>>, vector<128x128xbf16>
    %c0_3 = arith.constant 0 : index
    %c0_4 = arith.constant 0 : index
    %2 = vector.load %arg5[%c0_3, %c0_4] : memref<128x128xbf16, #tpu.memory_space<vmem>>, vector<128x128xbf16>
    %c0_5 = arith.constant 0 : index
    %c0_6 = arith.constant 0 : index
    %3 = vector.load %arg7[%c0_5, %c0_6] : memref<128x128xbf16, #tpu.memory_space<vmem>>, vector<128x128xbf16>
    %c0_7 = arith.constant 0 : index
    %c0_8 = arith.constant 0 : index
    %4 = vector.load %arg4[%c0_7, %c0_8] : memref<1x128xf32, #tpu.memory_space<vmem>>, vector<1x128xf32>
    %c0_9 = arith.constant 0 : index
    %c0_10 = arith.constant 0 : index
    %5 = vector.load %arg6[%c0_9, %c0_10] : memref<1x128xf32, #tpu.memory_space<vmem>>, vector<1x128xf32>
    %c0_11 = arith.constant 0 : index
    %c0_12 = arith.constant 0 : index
    %6 = vector.load %arg8[%c0_11, %c0_12] : memref<1x128xf32, #tpu.memory_space<vmem>>, vector<1x128xf32>
    %c0_13 = arith.constant 0 : index
    %c0_14 = arith.constant 0 : index
    %c0_15 = arith.constant 0 : index
    %7 = vector.load %arg1[%c0_13, %c0_14, %c0_15] : memref<1x128x128xbf16, #tpu.memory_space<vmem>>, vector<1x128x128xbf16>
    %8 = vector.shape_cast %7 : vector<1x128x128xbf16> to vector<128x128xbf16>
    %cst = arith.constant dense<0.000000e+00> : vector<128x128xf32>
    %9 = tpu.matmul %0, %8, %cst {dimension_numbers = #tpu.dot_dimension_numbers<[1], [0], [0], [1], [0, 0, 1, 1], [], []>} : vector<128x128xbf16>, vector<128x128xbf16>, vector<128x128xf32> -> vector<128x128xf32>
    %10 = arith.truncf %9 : vector<128x128xf32> to vector<128x128xbf16>
    %cst_16 = arith.constant dense<0.000000e+00> : vector<128x128xf32>
    %11 = tpu.matmul %10, %2, %cst_16 {dimension_numbers = #tpu.dot_dimension_numbers<[1], [0], [0], [1], [0, 0, 1, 1], [], []>} : vector<128x128xbf16>, vector<128x128xbf16>, vector<128x128xf32> -> vector<128x128xf32>
    %12 = vector.broadcast %5 : vector<1x128xf32> to vector<128x128xf32>
    %13 = arith.addf %11, %12 : vector<128x128xf32>
    %cst_17 = arith.constant 0.000000e+00 : f32
    %14 = vector.broadcast %cst_17 : f32 to vector<128x128xf32>
    %15 = arith.maximumf %13, %14 : vector<128x128xf32>
    %16 = arith.truncf %15 : vector<128x128xf32> to vector<128x128xbf16>
    %cst_18 = arith.constant dense<0.000000e+00> : vector<128x128xf32>
    %17 = tpu.matmul %16, %3, %cst_18 {dimension_numbers = #tpu.dot_dimension_numbers<[1], [0], [0], [1], [0, 0, 1, 1], [], []>} : vector<128x128xbf16>, vector<128x128xbf16>, vector<128x128xf32> -> vector<128x128xf32>
    %18 = arith.truncf %17 : vector<128x128xf32> to vector<128x128xbf16>
    %cst_19 = arith.constant dense<0.000000e+00> : vector<128x128xf32>
    %19 = tpu.matmul %8, %1, %cst_19 {dimension_numbers = #tpu.dot_dimension_numbers<[1], [0], [0], [1], [0, 0, 1, 1], [], []>} : vector<128x128xbf16>, vector<128x128xbf16>, vector<128x128xf32> -> vector<128x128xf32>
    %20 = vector.broadcast %4 : vector<1x128xf32> to vector<128x128xf32>
    %21 = arith.addf %19, %20 : vector<128x128xf32>
    %cst_20 = arith.constant dense<0.000000e+00> : vector<128x128xf32>
    %22 = tpu.matmul %0, %18, %cst_20 {dimension_numbers = #tpu.dot_dimension_numbers<[1], [0], [0], [1], [0, 0, 1, 1], [], []>} : vector<128x128xbf16>, vector<128x128xbf16>, vector<128x128xf32> -> vector<128x128xf32>
    %23 = vector.broadcast %6 : vector<1x128xf32> to vector<128x128xf32>
    %24 = arith.addf %22, %23 : vector<128x128xf32>
    %25 = arith.addf %24, %21 : vector<128x128xf32>
    %c0_21 = arith.constant 0 : index
    %c0_22 = arith.constant 0 : index
    %c0_23 = arith.constant 0 : index
    %26 = vector.load %arg9[%c0_21, %c0_22, %c0_23] : memref<1x128x128xf32, #tpu.memory_space<vmem>>, vector<1x128x128xf32>
    %27 = vector.shape_cast %26 : vector<1x128x128xf32> to vector<128x128xf32>
    %28 = vector.shape_cast %25 : vector<128x128xf32> to vector<1x128x128xf32>
    tpu.vector_store %arg9[%c0_21, %c0_22, %c0_23], %28 {strides = array<i32>} : memref<1x128x128xf32, #tpu.memory_space<vmem>>, vector<1x128x128xf32>,
    return
  }
  func.func @transform_0(%arg0: i32) -> (i32, i32, i32) {
    %c0_i32 = arith.constant 0 : i32
    %c0_i32_0 = arith.constant 0 : i32
    %c0_i32_1 = arith.constant 0 : i32
    return %arg0, %c0_i32, %c0_i32_0 : i32, i32, i32
  }
  func.func @transform_1(%arg0: i32) -> (i32, i32) {
    %c0_i32 = arith.constant 0 : i32
    %c0_i32_0 = arith.constant 0 : i32
    %c0_i32_1 = arith.constant 0 : i32
    return %c0_i32, %c0_i32_0 : i32, i32
  }
  func.func @transform_2(%arg0: i32) -> (i32, i32) {
    %c0_i32 = arith.constant 0 : i32
    %c0_i32_0 = arith.constant 0 : i32
    %c0_i32_1 = arith.constant 0 : i32
    return %c0_i32, %c0_i32_0 : i32, i32
  }
  func.func @transform_3(%arg0: i32) -> (i32, i32) {
    %c0_i32 = arith.constant 0 : i32
    %c0_i32_0 = arith.constant 0 : i32
    %c0_i32_1 = arith.constant 0 : i32
    return %c0_i32, %c0_i32_0 : i32, i32
  }
  func.func @transform_4(%arg0: i32) -> (i32, i32) {
    %c0_i32 = arith.constant 0 : i32
    %c0_i32_0 = arith.constant 0 : i32
    %c0_i32_1 = arith.constant 0 : i32
    return %c0_i32, %c0_i32_0 : i32, i32
  }
  func.func @transform_5(%arg0: i32) -> (i32, i32) {
    %c0_i32 = arith.constant 0 : i32
    %c0_i32_0 = arith.constant 0 : i32
    %c0_i32_1 = arith.constant 0 : i32
    return %c0_i32, %c0_i32_0 : i32, i32
  }
  func.func @transform_6(%arg0: i32) -> (i32, i32) {
    %c0_i32 = arith.constant 0 : i32
    %c0_i32_0 = arith.constant 0 : i32
    %c0_i32_1 = arith.constant 0 : i32
    return %c0_i32, %c0_i32_0 : i32, i32
  }
  func.func @transform_7(%arg0: i32) -> (i32, i32) {
    %c0_i32 = arith.constant 0 : i32
    %c0_i32_0 = arith.constant 0 : i32
    %c0_i32_1 = arith.constant 0 : i32
    return %c0_i32, %c0_i32_0 : i32, i32
  }
  func.func @transform_8(%arg0: i32) -> (i32, i32, i32) {
    %c0_i32 = arith.constant 0 : i32
    %c0_i32_0 = arith.constant 0 : i32
    %c0_i32_1 = arith.constant 0 : i32
    return %arg0, %c0_i32, %c0_i32_0 : i32, i32, i32
  }
}

</mosaic_0001>

<llo_original>
// kernel: forward.1
$region0: #{forward.1}
  #allocation0 [shape = 'u32[]', space=smem, size = 0x4, offset = 0x4, fixed_abs, tag = 'smem constant byte address 0x4 - core index']
  #allocation1 [shape = 'u32[72,128]{1,0:T(1,128)}', space=vmem, size = 0x9000, scoped, tag = 'internal scratch']
  %s0 = inlined_call_operand.vmem [shape: bf16[2,128,128], index: 0, kind: input, shape index: {}]
  %s1 = inlined_call_operand.vmem [shape: bf16[128,128], index: 1, kind: input, shape index: {}]
  %s2 = inlined_call_operand.vmem [shape: bf16[128,128], index: 2, kind: input, shape index: {}]
  %s3 = inlined_call_operand.vmem [shape: f32[1,128], index: 3, kind: input, shape index: {}]
  %s4 = inlined_call_operand.hbm [shape: bf16[128,128], index: 4, kind: input, shape index: {}]
  %s5 = inlined_call_operand.vmem [shape: f32[1,128], index: 5, kind: input, shape index: {}]
  %s6 = inlined_call_operand.hbm [shape: bf16[128,128], index: 6, kind: input, shape index: {}]
  %s7 = inlined_call_operand.vmem [shape: f32[1,128], index: 7, kind: input, shape index: {}]
  %s8 = inlined_call_operand.vmem [shape: f32[2,128,128], index: 8, kind: output, shape index: {}]
  %s9 = sld [smem:[#allocation0]]
  $region73: #{forward.1} parent=0
    _
  %s11 = ssub.s32 1, %s9
  %s12 = scalar_select 0, %s11, %s9
  $region1: #{forward.1} parent=0
    #allocation2 [shape = 'u8[32768]{0}', space=vmem, size = 0x8000, scoped, tag = 'input window, operand 4, single buffered']
    #allocation3 [shape = 's32[2]{0}', space=sflag, size = 0x8, scoped, tag = 'scoped memory for forward.1']
    #allocation4 [shape = 'u8[32768]{0}', space=vmem, size = 0x8000, scoped, tag = 'input window, operand 6, single buffered']
    #allocation5 [shape = 's32[1]{0}', space=sflag, size = 0x4, scoped, tag = 'scoped memory for forward.1']
    %13 = vsyncpa [#allocation3], 0
    %14 = vsyncpa [#allocation5], 0
    loop: start=0, step=1, limit=4
    $region2: #{forward.1} parent=1 // loop_pre_header
      _
    $region3: #{forward.1} parent=1 // loop_header
      %s16 = sphi 0, %s20
      %p17 = scmp.ge.s32.totalorder %s16, 4
      %s26 = sphi 0, %s28
      %s29 = sphi 0, %s26
      %s30 = sphi 0, %s29
      %s46 = sphi 0, %s30
      %s50 = sphi 0, %s50
      %s52 = sphi 0, %s50
      %s53 = sphi 0, %s52
      %s67 = sphi 0, %s53
      %s71 = sphi 0, %s71
      %s73 = sphi 0, %s71
      %s74 = sphi 0, %s73
      %s88 = sphi 0, %s74
      %s92 = sphi 0, %s92
      %s94 = sphi 0, %s92
      %s95 = sphi 0, %s94
      %s109 = sphi 0, %s95
      %s113 = sphi 0, %s113
      %s115 = sphi 0, %s113
      %s116 = sphi 0, %s115
      %s130 = sphi 0, %s116
      %s134 = sphi 0, %s134
      %s136 = sphi 0, %s134
      %s137 = sphi 0, %s136
      %s151 = sphi 0, %s137
      %s155 = sphi 0, %s155
      %s157 = sphi 0, %s155
      %s158 = sphi 0, %s157
      %s172 = sphi 0, %s158
      %s176 = sphi 0, %s176
      %s178 = sphi 0, %s176
      %s179 = sphi 0, %s178
      %s193 = sphi 0, %s179
      %s199 = sphi 0, %s201
      %s202 = sphi 0, %s199
      %s203 = sphi 0, %s202
      %s219 = sphi 0, %s203
    $region4: #{forward.1} parent=1 // loop_header_branch
      %19 = sbr.rel (%p17) target = $region8
    $region5: #{forward.1} parent=1 // loop_body
      %s21 = ssub.s32 %s16, 1
      %s22 = ssub.s32 %s16, 2
      %s23 = sadd.s32 %s16, 1
      %s24 = ssub.s32 %s16, %s23
      %p25 = scmp.eq.s32.totalorder %s24, 0
      %s27 = sadd.s32 %s26, 1
      %s28 = scalar_select %p25, %s26, %s27
      %p31 = pneg %p25
      %p32 = scmp.eq.s32.totalorder %s16, 1
      %p33 = por %p31, %p32
      %p34 = scmp.ne.s32.totalorder %s26, %s29
      %p35 = scmp.eq.s32.totalorder %s16, 0
      %p36 = por %p34, %p35
      %p37 = scmp.ne.s32.totalorder %s26, %s29
      %p38 = scmp.eq.s32.totalorder %s21, 1
      %p39 = por %p37, %p38
      %p40 = scmp.ne.s32.totalorder %s29, %s30
      %p41 = scmp.eq.s32.totalorder %s21, 0
      %p42 = por %p40, %p41
      %p43 = scmp.ne.s32.totalorder %s29, %s30
      %p44 = scmp.eq.s32.totalorder %s22, 1
      %p45 = por %p43, %p44
      %p47 = scmp.ne.s32.totalorder %s30, %s46
      %p48 = scmp.eq.s32.totalorder %s22, 0
      %p49 = por %p47, %p48
      %s51 = sadd.s32 %s50, 1
      %p54 = scmp.eq.s32.totalorder %s16, 1
      %p55 = scmp.ne.s32.totalorder %s50, %s52
      %p56 = scmp.eq.s32.totalorder %s16, 0
      %p57 = por %p55, %p56
      %p58 = scmp.ne.s32.totalorder %s50, %s52
      %p59 = scmp.eq.s32.totalorder %s21, 1
      %p60 = por %p58, %p59
      %p61 = scmp.ne.s32.totalorder %s52, %s53
      %p62 = scmp.eq.s32.totalorder %s21, 0
      %p63 = por %p61, %p62
      %p64 = scmp.ne.s32.totalorder %s52, %s53
      %p65 = scmp.eq.s32.totalorder %s22, 1
      %p66 = por %p64, %p65
      %p68 = scmp.ne.s32.totalorder %s53, %s67
      %p69 = scmp.eq.s32.totalorder %s22, 0
      %p70 = por %p68, %p69
      %s72 = sadd.s32 %s71, 1
      %p75 = scmp.eq.s32.totalorder %s16, 1
      %p76 = scmp.ne.s32.totalorder %s71, %s73
      %p77 = scmp.eq.s32.totalorder %s16, 0
      %p78 = por %p76, %p77
      %p79 = scmp.ne.s32.totalorder %s71, %s73
      %p80 = scmp.eq.s32.totalorder %s21, 1
      %p81 = por %p79, %p80
      %p82 = scmp.ne.s32.totalorder %s73, %s74
      %p83 = scmp.eq.s32.totalorder %s21, 0
      %p84 = por %p82, %p83
      %p85 = scmp.ne.s32.totalorder %s73, %s74
      %p86 = scmp.eq.s32.totalorder %s22, 1
      %p87 = por %p85, %p86
      %p89 = scmp.ne.s32.totalorder %s74, %s88
      %p90 = scmp.eq.s32.totalorder %s22, 0
      %p91 = por %p89, %p90
      %s93 = sadd.s32 %s92, 1
      %p96 = scmp.eq.s32.totalorder %s16, 1
      %p97 = scmp.ne.s32.totalorder %s92, %s94
      %p98 = scmp.eq.s32.totalorder %s16, 0
      %p99 = por %p97, %p98
      %p100 = scmp.ne.s32.totalorder %s92, %s94
      %p101 = scmp.eq.s32.totalorder %s21, 1
      %p102 = por %p100, %p101
      %p103 = scmp.ne.s32.totalorder %s94, %s95
      %p104 = scmp.eq.s32.totalorder %s21, 0
      %p105 = por %p103, %p104
      %p106 = scmp.ne.s32.totalorder %s94, %s95
      %p107 = scmp.eq.s32.totalorder %s22, 1
      %p108 = por %p106, %p107
      %p110 = scmp.ne.s32.totalorder %s95, %s109
      %p111 = scmp.eq.s32.totalorder %s22, 0
      %p112 = por %p110, %p111
      %s114 = sadd.s32 %s113, 1
      %p117 = scmp.eq.s32.totalorder %s16, 1
      %p118 = scmp.ne.s32.totalorder %s113, %s115
      %p119 = scmp.eq.s32.totalorder %s16, 0
      %p120 = por %p118, %p119
      %p121 = scmp.ne.s32.totalorder %s113, %s115
      %p122 = scmp.eq.s32.totalorder %s21, 1
      %p123 = por %p121, %p122
      %p124 = scmp.ne.s32.totalorder %s115, %s116
      %p125 = scmp.eq.s32.totalorder %s21, 0
      %p126 = por %p124, %p125
      %p127 = scmp.ne.s32.totalorder %s115, %s116
      %p128 = scmp.eq.s32.totalorder %s22, 1
      %p129 = por %p127, %p128
      %p131 = scmp.ne.s32.totalorder %s116, %s130
      %p132 = scmp.eq.s32.totalorder %s22, 0
      %p133 = por %p131, %p132
      %s135 = sadd.s32 %s134, 1
      %p138 = scmp.eq.s32.totalorder %s16, 1
      %p139 = scmp.ne.s32.totalorder %s134, %s136
      %p140 = scmp.eq.s32.totalorder %s16, 0
      %p141 = por %p139, %p140
      %p142 = scmp.ne.s32.totalorder %s134, %s136
      %p143 = scmp.eq.s32.totalorder %s21, 1
      %p144 = por %p142, %p143
      %p145 = scmp.ne.s32.totalorder %s136, %s137
      %p146 = scmp.eq.s32.totalorder %s21, 0
      %p147 = por %p145, %p146
      %p148 = scmp.ne.s32.totalorder %s136, %s137
      %p149 = scmp.eq.s32.totalorder %s22, 1
      %p150 = por %p148, %p149
      %p152 = scmp.ne.s32.totalorder %s137, %s151
      %p153 = scmp.eq.s32.totalorder %s22, 0
      %p154 = por %p152, %p153
      %s156 = sadd.s32 %s155, 1
      %p159 = scmp.eq.s32.totalorder %s16, 1
      %p160 = scmp.ne.s32.totalorder %s155, %s157
      %p161 = scmp.eq.s32.totalorder %s16, 0
      %p162 = por %p160, %p161
      %p163 = scmp.ne.s32.totalorder %s155, %s157
      %p164 = scmp.eq.s32.totalorder %s21, 1
      %p165 = por %p163, %p164
      %p166 = scmp.ne.s32.totalorder %s157, %s158
      %p167 = scmp.eq.s32.totalorder %s21, 0
      %p168 = por %p166, %p167
      %p169 = scmp.ne.s32.totalorder %s157, %s158
      %p170 = scmp.eq.s32.totalorder %s22, 1
      %p171 = por %p169, %p170
      %p173 = scmp.ne.s32.totalorder %s158, %s172
      %p174 = scmp.eq.s32.totalorder %s22, 0
      %p175 = por %p173, %p174
      %s177 = sadd.s32 %s176, 1
      %p180 = scmp.eq.s32.totalorder %s16, 1
      %p181 = scmp.ne.s32.totalorder %s176, %s178
      %p182 = scmp.eq.s32.totalorder %s16, 0
      %p183 = por %p181, %p182
      %p184 = scmp.ne.s32.totalorder %s176, %s178
      %p185 = scmp.eq.s32.totalorder %s21, 1
      %p186 = por %p184, %p185
      %p187 = scmp.ne.s32.totalorder %s178, %s179
      %p188 = scmp.eq.s32.totalorder %s21, 0
      %p189 = por %p187, %p188
      %p190 = scmp.ne.s32.totalorder %s178, %s179
      %p191 = scmp.eq.s32.totalorder %s22, 1
      %p192 = por %p190, %p191
      %p194 = scmp.ne.s32.totalorder %s179, %s193
      %p195 = scmp.eq.s32.totalorder %s22, 0
      %p196 = por %p194, %p195
      %s197 = ssub.s32 %s16, %s23
      %p198 = scmp.eq.s32.totalorder %s197, 0
      %s200 = sadd.s32 %s199, 1
      %s201 = scalar_select %p198, %s199, %s200
      %p204 = pneg %p198
      %p205 = scmp.eq.s32.totalorder %s16, 1
      %p206 = por %p204, %p205
      %p207 = scmp.ne.s32.totalorder %s199, %s202
      %p208 = scmp.eq.s32.totalorder %s16, 0
      %p209 = por %p207, %p208
      %p210 = scmp.ne.s32.totalorder %s199, %s202
      %p211 = scmp.eq.s32.totalorder %s21, 1
      %p212 = por %p210, %p211
      %p213 = scmp.ne.s32.totalorder %s202, %s203
      %p214 = scmp.eq.s32.totalorder %s21, 0
      %p215 = por %p213, %p214
      %p216 = scmp.ne.s32.totalorder %s202, %s203
      %p217 = scmp.eq.s32.totalorder %s22, 1
      %p218 = por %p216, %p217
      %p220 = scmp.ne.s32.totalorder %s203, %s219
      %p221 = scmp.eq.s32.totalorder %s22, 0
      %p222 = por %p220, %p221
      %p223 = scmp.le.s32.totalorder 1, %s16
      %p224 = scmp.lt.s32.totalorder %s16, 3
      %p225 = pnand %p223, %p224
      %p226 = pneg %p225
      // Predicated region
      $region9: #{forward.1} parent=5 // pred_check
        _
      $region10: #{forward.1} parent=5 // pred_check_branch
        %228 = sbr.rel (%p225) target = $region12
      $region11: #{forward.1} parent=5 // pred_region
        %s229 = ssub.s32 %s16, 1
        // Predicated region
        $region13: #{forward.1} parent=11 // pred_check
          %p230 = pneg %p63
        $region14: #{forward.1} parent=11 // pred_check_branch
          %232 = sbr.rel (%p230) target = $region16
        $region15: #{forward.1} parent=11 // pred_region
          _
        $region16: #{forward.1} parent=11 // pred_fallthru
          _
        // Predicated region
        $region17: #{forward.1} parent=11 // pred_check
          %p233 = pneg %p84
        $region18: #{forward.1} parent=11 // pred_check_branch
          %235 = sbr.rel (%p233) target = $region20
        $region19: #{forward.1} parent=11 // pred_region
          _
        $region20: #{forward.1} parent=11 // pred_fallthru
          _
        // Predicated region
        $region21: #{forward.1} parent=11 // pred_check
          %p236 = pneg %p105
        $region22: #{forward.1} parent=11 // pred_check_branch
          %238 = sbr.rel (%p236) target = $region24
        $region23: #{forward.1} parent=11 // pred_region
          _
        $region24: #{forward.1} parent=11 // pred_fallthru
          _
        // Predicated region
        $region25: #{forward.1} parent=11 // pred_check
          %p239 = pneg %p126
        $region26: #{forward.1} parent=11 // pred_check_branch
          %241 = sbr.rel (%p239) target = $region28
        $region27: #{forward.1} parent=11 // pred_region
          %243 = vsyncadd [#allocation3], 0
          %s244 = sshll.u32 %s4, 4
          %s245 = int_to_ptr.hbm [resolvable:$true] %s244
          %s246 = sshll.u32 [#allocation2], 4
          %s247 = int_to_ptr.vmem [resolvable:$true] %s246
          %252 = dma.hbm_to_vmem [thread:$0]  %s245, 1024, %s247, [#allocation3], 64, 64, 4
        $region28: #{forward.1} parent=11 // pred_fallthru
          _
        // Predicated region
        $region29: #{forward.1} parent=11 // pred_check
          %p253 = pneg %p147
        $region30: #{forward.1} parent=11 // pred_check_branch
          %255 = sbr.rel (%p253) target = $region32
        $region31: #{forward.1} parent=11 // pred_region
          _
        $region32: #{forward.1} parent=11 // pred_fallthru
          _
        // Predicated region
        $region33: #{forward.1} parent=11 // pred_check
          %p256 = pneg %p168
        $region34: #{forward.1} parent=11 // pred_check_branch
          %258 = sbr.rel (%p256) target = $region36
        $region35: #{forward.1} parent=11 // pred_region
          %260 = vsyncadd [#allocation5], 0
          %s261 = sshll.u32 %s6, 4
          %s262 = int_to_ptr.hbm [resolvable:$true] %s261
          %s263 = sshll.u32 [#allocation4], 4
          %s264 = int_to_ptr.vmem [resolvable:$true] %s263
          %269 = dma.hbm_to_vmem [thread:$0]  %s262, 1024, %s264, [#allocation5], 64, 64, 4
        $region36: #{forward.1} parent=11 // pred_fallthru
          _
        // Predicated region
        $region37: #{forward.1} parent=11 // pred_check
          %p270 = pneg %p189
        $region38: #{forward.1} parent=11 // pred_check_branch
          %272 = sbr.rel (%p270) target = $region40
        $region39: #{forward.1} parent=11 // pred_region
          _
        $region40: #{forward.1} parent=11 // pred_fallthru
          _
      $region12: #{forward.1} parent=5 // pred_fallthru
        _
      %p273 = scmp.lt.s32.totalorder %s16, 2
      // Predicated region
      $region41: #{forward.1} parent=5 // pred_check
        %p274 = pneg %p273
      $region42: #{forward.1} parent=5 // pred_check_branch
        %276 = sbr.rel (%p274) target = $region44
      $region43: #{forward.1} parent=5 // pred_region
        // Predicated region
        $region45: #{forward.1} parent=43 // pred_check
          %p277 = pneg %p36
        $region46: #{forward.1} parent=43 // pred_check_branch
          %279 = sbr.rel (%p277) target = $region48
        $region47: #{forward.1} parent=43 // pred_region
          %p280 = scmp.lt.s32.totalorder %s16, 1
          %s281 = scalar_select %p280, %s16, 1
          %s282 = smul.addr %s281, 16
          %s283 = smul.addr %s282, 4
          %s284 = scalar_lea.vmem %s0, %s283
        $region48: #{forward.1} parent=43 // pred_fallthru
          _
      $region44: #{forward.1} parent=5 // pred_fallthru
        _
      %p285 = scmp.le.s32.totalorder 1, %s16
      %p286 = scmp.lt.s32.totalorder %s16, 3
      %p287 = pnand %p285, %p286
      %p288 = pneg %p287
      // Predicated region
      $region49: #{forward.1} parent=5 // pred_check
        _
      $region50: #{forward.1} parent=5 // pred_check_branch
        %290 = sbr.rel (%p287) target = $region52
      $region51: #{forward.1} parent=5 // pred_region
        %s291 = ssub.s32 %s16, 1
        // Predicated region
        $region53: #{forward.1} parent=51 // pred_check
          %p292 = pneg %p126
        $region54: #{forward.1} parent=51 // pred_check_branch
          %294 = sbr.rel (%p292) target = $region56
        $region55: #{forward.1} parent=51 // pred_region
          %296 = dma.done [#allocation3], 1024
        $region56: #{forward.1} parent=51 // pred_fallthru
          _
        // Predicated region
        $region57: #{forward.1} parent=51 // pred_check
          %p297 = pneg %p168
        $region58: #{forward.1} parent=51 // pred_check_branch
          %299 = sbr.rel (%p297) target = $region60
        $region59: #{forward.1} parent=51 // pred_region
          %301 = dma.done [#allocation5], 1024
        $region60: #{forward.1} parent=51 // pred_fallthru
          _
        %p302 = scmp.lt.s32.totalorder %s21, 1
        %s303 = scalar_select %p302, %s21, 1
        %s304 = smul.addr %s303, 16
        %s305 = smul.addr %s304, 4
        %s306 = scalar_lea.vmem %s0, %s305
        %p307 = pneg %p42
        %p308 = pneg %p39
        %p309 = pneg %p63
        %p310 = pneg %p60
        %p311 = pneg %p84
        %p312 = pneg %p81
        %p313 = pneg %p105
        %p314 = pneg %p102
        %p315 = pneg %p126
        %p316 = pneg %p123
        %p317 = pneg %p147
        %p318 = pneg %p144
        %p319 = pneg %p168
        %p320 = pneg %p165
        %p321 = pneg %p189
        %p322 = pneg %p186
        %p323 = pneg %p215
        %p324 = pneg %p212
        %p325 = scmp.lt.s32.totalorder %s21, 1
        %s326 = scalar_select %p325, %s21, 1
        %s327 = smul.addr %s326, 16
        %s328 = smul.addr %s327, 8
        %s329 = scalar_lea.vmem %s8, %s328
        %p330 = scmp.lt.s32.totalorder %s21, 1
        %s331 = scalar_select %p330, %s21, 1
        %s332 = smul.addr %s331, 16
        %s333 = smul.addr %s332, 4
        %s334 = scalar_lea.vmem %s0, %s333
        %p335 = scmp.lt.s32.totalorder %s21, 1
        %s336 = scalar_select %p335, %s21, 1
        %s337 = smul.addr %s336, 16
        %s338 = smul.addr %s337, 8
        %s339 = scalar_lea.vmem %s8, %s338
        %v340 = vld [vmem:[%s1] sm:$0xf]
        %v341 = vld [vmem:[%s1 + $0x4] sm:$0xf]
        %v342 = vld [vmem:[%s1 + $0x8] sm:$0xf]
        %v343 = vld [vmem:[%s1 + $0xc] sm:$0xf]
        %v344 = vld [vmem:[%s1 + $0x10] sm:$0xf]
        %v345 = vld [vmem:[%s1 + $0x14] sm:$0xf]
        %v346 = vld [vmem:[%s1 + $0x18] sm:$0xf]
        %v347 = vld [vmem:[%s1 + $0x1c] sm:$0xf]
        %v348 = vld [vmem:[%s1 + $0x20] sm:$0xf]
        %v349 = vld [vmem:[%s1 + $0x24] sm:$0xf]
        %v350 = vld [vmem:[%s1 + $0x28] sm:$0xf]
        %v351 = vld [vmem:[%s1 + $0x2c] sm:$0xf]
        %v352 = vld [vmem:[%s1 + $0x30] sm:$0xf]
        %v353 = vld [vmem:[%s1 + $0x34] sm:$0xf]
        %v354 = vld [vmem:[%s1 + $0x38] sm:$0xf]
        %v355 = vld [vmem:[%s1 + $0x3c] sm:$0xf]
        %v356 = vld [vmem:[%s2] sm:$0xf]
        %v357 = vld [vmem:[%s2 + $0x4] sm:$0xf]
        %v358 = vld [vmem:[%s2 + $0x8] sm:$0xf]
        %v359 = vld [vmem:[%s2 + $0xc] sm:$0xf]
        %v360 = vld [vmem:[%s2 + $0x10] sm:$0xf]
        %v361 = vld [vmem:[%s2 + $0x14] sm:$0xf]
        %v362 = vld [vmem:[%s2 + $0x18] sm:$0xf]
        %v363 = vld [vmem:[%s2 + $0x1c] sm:$0xf]
        %v364 = vld [vmem:[%s2 + $0x20] sm:$0xf]
        %v365 = vld [vmem:[%s2 + $0x24] sm:$0xf]
        %v366 = vld [vmem:[%s2 + $0x28] sm:$0xf]
        %v367 = vld [vmem:[%s2 + $0x2c] sm:$0xf]
        %v368 = vld [vmem:[%s2 + $0x30] sm:$0xf]
        %v369 = vld [vmem:[%s2 + $0x34] sm:$0xf]
        %v370 = vld [vmem:[%s2 + $0x38] sm:$0xf]
        %v371 = vld [vmem:[%s2 + $0x3c] sm:$0xf]
        %v372 = vld [vmem:[#allocation2] sm:$0xf]
        %v373 = vld [vmem:[#allocation2 + $0x4] sm:$0xf]
        %v374 = vld [vmem:[#allocation2 + $0x8] sm:$0xf]
        %v375 = vld [vmem:[#allocation2 + $0xc] sm:$0xf]
        %v376 = vld [vmem:[#allocation2 + $0x10] sm:$0xf]
        %v377 = vld [vmem:[#allocation2 + $0x14] sm:$0xf]
        %v378 = vld [vmem:[#allocation2 + $0x18] sm:$0xf]
        %v379 = vld [vmem:[#allocation2 + $0x1c] sm:$0xf]
        %v380 = vld [vmem:[#allocation2 + $0x20] sm:$0xf]
        %v381 = vld [vmem:[#allocation2 + $0x24] sm:$0xf]
        %v382 = vld [vmem:[#allocation2 + $0x28] sm:$0xf]
        %v383 = vld [vmem:[#allocation2 + $0x2c] sm:$0xf]
        %v384 = vld [vmem:[#allocation2 + $0x30] sm:$0xf]
        %v385 = vld [vmem:[#allocation2 + $0x34] sm:$0xf]
        %v386 = vld [vmem:[#allocation2 + $0x38] sm:$0xf]
        %v387 = vld [vmem:[#allocation2 + $0x3c] sm:$0xf]
        %v388 = vld [vmem:[#allocation4] sm:$0xf]
        %v389 = vld [vmem:[#allocation4 + $0x4] sm:$0xf]
        %v390 = vld [vmem:[#allocation4 + $0x8] sm:$0xf]
        %v391 = vld [vmem:[#allocation4 + $0xc] sm:$0xf]
        %v392 = vld [vmem:[#allocation4 + $0x10] sm:$0xf]
        %v393 = vld [vmem:[#allocation4 + $0x14] sm:$0xf]
        %v394 = vld [vmem:[#allocation4 + $0x18] sm:$0xf]
        %v395 = vld [vmem:[#allocation4 + $0x1c] sm:$0xf]
        %v396 = vld [vmem:[#allocation4 + $0x20] sm:$0xf]
        %v397 = vld [vmem:[#allocation4 + $0x24] sm:$0xf]
        %v398 = vld [vmem:[#allocation4 + $0x28] sm:$0xf]
        %v399 = vld [vmem:[#allocation4 + $0x2c] sm:$0xf]
        %v400 = vld [vmem:[#allocation4 + $0x30] sm:$0xf]
        %v401 = vld [vmem:[#allocation4 + $0x34] sm:$0xf]
        %v402 = vld [vmem:[#allocation4 + $0x38] sm:$0xf]
        %v403 = vld [vmem:[#allocation4 + $0x3c] sm:$0xf]
        %v404 = vld [vmem:[%s3] sm:$0x1]
        %v405 = vld [vmem:[%s5] sm:$0x1]
        %v406 = vld [vmem:[%s7] sm:$0x1]
        %v407 = vld [vmem:[%s334] sm:$0xf]
        %v408 = vld [vmem:[%s334 + $0x4] sm:$0xf]
        %v409 = vld [vmem:[%s334 + $0x8] sm:$0xf]
        %v410 = vld [vmem:[%s334 + $0xc] sm:$0xf]
        %v411 = vld [vmem:[%s334 + $0x10] sm:$0xf]
        %v412 = vld [vmem:[%s334 + $0x14] sm:$0xf]
        %v413 = vld [vmem:[%s334 + $0x18] sm:$0xf]
        %v414 = vld [vmem:[%s334 + $0x1c] sm:$0xf]
        %v415 = vld [vmem:[%s334 + $0x20] sm:$0xf]
        %v416 = vld [vmem:[%s334 + $0x24] sm:$0xf]
        %v417 = vld [vmem:[%s334 + $0x28] sm:$0xf]
        %v418 = vld [vmem:[%s334 + $0x2c] sm:$0xf]
        %v419 = vld [vmem:[%s334 + $0x30] sm:$0xf]
        %v420 = vld [vmem:[%s334 + $0x34] sm:$0xf]
        %v421 = vld [vmem:[%s334 + $0x38] sm:$0xf]
        %v422 = vld [vmem:[%s334 + $0x3c] sm:$0xf]
        %v439 = vunpack.c.l.b16 %v340
        %v440 = vunpack.c.l.b16 %v341
        %v441 = vunpack.c.l.b16 %v342
        %v442 = vunpack.c.l.b16 %v343
        %v443 = vunpack.c.l.b16 %v344
        %v444 = vunpack.c.l.b16 %v345
        %v445 = vunpack.c.l.b16 %v346
        %v446 = vunpack.c.l.b16 %v347
        %v447 = vunpack.c.l.b16 %v348
        %v448 = vunpack.c.l.b16 %v349
        %v449 = vunpack.c.l.b16 %v350
        %v450 = vunpack.c.l.b16 %v351
        %v451 = vunpack.c.l.b16 %v352
        %v452 = vunpack.c.l.b16 %v353
        %v453 = vunpack.c.l.b16 %v354
        %v454 = vunpack.c.l.b16 %v355
        %v455 = vpack.c.b16 %v440, %v439
        %v456 = vpack.c.b16 %v442, %v441
        %v457 = vpack.c.b16 %v444, %v443
        %v458 = vpack.c.b16 %v446, %v445
        %v459 = vpack.c.b16 %v448, %v447
        %v460 = vpack.c.b16 %v450, %v449
        %v461 = vpack.c.b16 %v452, %v451
        %v462 = vpack.c.b16 %v454, %v453
        %v487 = vunpack.c.l.b16 %v407
        %v488 = vunpack.c.l.b16 %v408
        %v489 = vunpack.c.l.b16 %v409
        %v490 = vunpack.c.l.b16 %v410
        %v491 = vunpack.c.l.b16 %v411
        %v492 = vunpack.c.l.b16 %v412
        %v493 = vunpack.c.l.b16 %v413
        %v494 = vunpack.c.l.b16 %v414
        %v495 = vunpack.c.l.b16 %v415
        %v496 = vunpack.c.l.b16 %v416
        %v497 = vunpack.c.l.b16 %v417
        %v498 = vunpack.c.l.b16 %v418
        %v499 = vunpack.c.l.b16 %v419
        %v500 = vunpack.c.l.b16 %v420
        %v501 = vunpack.c.l.b16 %v421
        %v502 = vunpack.c.l.b16 %v422
        %v503 = vpack.c.b16 %v488, %v487
        %v504 = vpack.c.b16 %v490, %v489
        %v505 = vpack.c.b16 %v492, %v491
        %v506 = vpack.c.b16 %v494, %v493
        %v507 = vpack.c.b16 %v496, %v495
        %v508 = vpack.c.b16 %v498, %v497
        %v509 = vpack.c.b16 %v500, %v499
        %v510 = vpack.c.b16 %v502, %v501
        %519 = vmatpush.bf16.msra.mxu0 %v510
        %520 = vmatpush.bf16.msra.mxu0 %v509
        %521 = vmatpush.bf16.msra.mxu0 %v508
        %522 = vmatpush.bf16.msra.mxu0 %v507
        %523 = vmatpush.bf16.msra.mxu0 %v506
        %524 = vmatpush.bf16.msra.mxu0 %v505
        %525 = vmatpush.bf16.msra.mxu0 %v504
        %526 = vmatpush.bf16.msra.mxu0 %v503
        %527 = vmatmul.bf16.gmra.mxu0 %v455
        %v528 = vpop.f32.mrf.mxu0
        %v529 = vadd.f32 0.0, %v528
        %v530 = vpop.f32.mrf.mxu0
        %v531 = vadd.f32 0.0, %v530
        %532 = vmatmul.bf16.gmra.mxu0 %v456
        %v533 = vpop.f32.mrf.mxu0
        %v534 = vadd.f32 0.0, %v533
        %v535 = vpop.f32.mrf.mxu0
        %v536 = vadd.f32 0.0, %v535
        %537 = vmatmul.bf16.gmra.mxu0 %v457
        %v538 = vpop.f32.mrf.mxu0
        %v539 = vadd.f32 0.0, %v538
        %v540 = vpop.f32.mrf.mxu0
        %v541 = vadd.f32 0.0, %v540
        %542 = vmatmul.bf16.gmra.mxu0 %v458
        %v543 = vpop.f32.mrf.mxu0
        %v544 = vadd.f32 0.0, %v543
        %v545 = vpop.f32.mrf.mxu0
        %v546 = vadd.f32 0.0, %v545
        %547 = vmatmul.bf16.gmra.mxu0 %v459
        %v548 = vpop.f32.mrf.mxu0
        %v549 = vadd.f32 0.0, %v548
        %v550 = vpop.f32.mrf.mxu0
        %v551 = vadd.f32 0.0, %v550
        %552 = vmatmul.bf16.gmra.mxu0 %v460
        %v553 = vpop.f32.mrf.mxu0
        %v554 = vadd.f32 0.0, %v553
        %v555 = vpop.f32.mrf.mxu0
        %v556 = vadd.f32 0.0, %v555
        %557 = vmatmul.bf16.gmra.mxu0 %v461
        %v558 = vpop.f32.mrf.mxu0
        %v559 = vadd.f32 0.0, %v558
        %v560 = vpop.f32.mrf.mxu0
        %v561 = vadd.f32 0.0, %v560
        %562 = vmatmul.bf16.gmra.mxu0 %v462
        %v563 = vpop.f32.mrf.mxu0
        %v564 = vadd.f32 0.0, %v563
        %v565 = vpop.f32.mrf.mxu0
        %v566 = vadd.f32 0.0, %v565
        %567 = vdwg.mxu0
        %v568 = vpack.c.bf16 %v531, %v529
        %v569 = vpack.c.bf16 %v536, %v534
        %v570 = vpack.c.bf16 %v541, %v539
        %v571 = vpack.c.bf16 %v546, %v544
        %v572 = vpack.c.bf16 %v551, %v549
        %v573 = vpack.c.bf16 %v556, %v554
        %v574 = vpack.c.bf16 %v561, %v559
        %v575 = vpack.c.bf16 %v566, %v564
        %v577 = vperm.slane %v405, 0
        %v595 = vunpack.c.l.b16 %v372
        %v596 = vunpack.c.l.b16 %v373
        %v597 = vunpack.c.l.b16 %v374
        %v598 = vunpack.c.l.b16 %v375
        %v599 = vunpack.c.l.b16 %v376
        %v600 = vunpack.c.l.b16 %v377
        %v601 = vunpack.c.l.b16 %v378
        %v602 = vunpack.c.l.b16 %v379
        %v603 = vunpack.c.l.b16 %v380
        %v604 = vunpack.c.l.b16 %v381
        %v605 = vunpack.c.l.b16 %v382
        %v606 = vunpack.c.l.b16 %v383
        %v607 = vunpack.c.l.b16 %v384
        %v608 = vunpack.c.l.b16 %v385
        %v609 = vunpack.c.l.b16 %v386
        %v610 = vunpack.c.l.b16 %v387
        %v611 = vpack.c.b16 %v596, %v595
        %v612 = vpack.c.b16 %v598, %v597
        %v613 = vpack.c.b16 %v600, %v599
        %v614 = vpack.c.b16 %v602, %v601
        %v615 = vpack.c.b16 %v604, %v603
        %v616 = vpack.c.b16 %v606, %v605
        %v617 = vpack.c.b16 %v608, %v607
        %v618 = vpack.c.b16 %v610, %v609
        %627 = vmatpush.bf16.msra.mxu0 %v618
        %628 = vmatpush.bf16.msra.mxu0 %v617
        %629 = vmatpush.bf16.msra.mxu0 %v616
        %630 = vmatpush.bf16.msra.mxu0 %v615
        %631 = vmatpush.bf16.msra.mxu0 %v614
        %632 = vmatpush.bf16.msra.mxu0 %v613
        %633 = vmatpush.bf16.msra.mxu0 %v612
        %634 = vmatpush.bf16.msra.mxu0 %v611
        %635 = vmatmul.bf16.gmra.mxu0 %v568
        %v636 = vpop.f32.mrf.mxu0
        %v637 = vadd.f32 %v577, %v636
        %v638 = vpop.f32.mrf.mxu0
        %v639 = vadd.f32 %v577, %v638
        %640 = vmatmul.bf16.gmra.mxu0 %v569
        %v641 = vpop.f32.mrf.mxu0
        %v642 = vadd.f32 %v577, %v641
        %v643 = vpop.f32.mrf.mxu0
        %v644 = vadd.f32 %v577, %v643
        %645 = vmatmul.bf16.gmra.mxu0 %v570
        %v646 = vpop.f32.mrf.mxu0
        %v647 = vadd.f32 %v577, %v646
        %v648 = vpop.f32.mrf.mxu0
        %v649 = vadd.f32 %v577, %v648
        %650 = vmatmul.bf16.gmra.mxu0 %v571
        %v651 = vpop.f32.mrf.mxu0
        %v652 = vadd.f32 %v577, %v651
        %v653 = vpop.f32.mrf.mxu0
        %v654 = vadd.f32 %v577, %v653
        %655 = vmatmul.bf16.gmra.mxu0 %v572
        %v656 = vpop.f32.mrf.mxu0
        %v657 = vadd.f32 %v577, %v656
        %v658 = vpop.f32.mrf.mxu0
        %v659 = vadd.f32 %v577, %v658
        %660 = vmatmul.bf16.gmra.mxu0 %v573
        %v661 = vpop.f32.mrf.mxu0
        %v662 = vadd.f32 %v577, %v661
        %v663 = vpop.f32.mrf.mxu0
        %v664 = vadd.f32 %v577, %v663
        %665 = vmatmul.bf16.gmra.mxu0 %v574
        %v666 = vpop.f32.mrf.mxu0
        %v667 = vadd.f32 %v577, %v666
        %v668 = vpop.f32.mrf.mxu0
        %v669 = vadd.f32 %v577, %v668
        %670 = vmatmul.bf16.gmra.mxu0 %v575
        %v671 = vpop.f32.mrf.mxu0
        %v672 = vadd.f32 %v577, %v671
        %v673 = vpop.f32.mrf.mxu0
        %v674 = vadd.f32 %v577, %v673
        %675 = vdwg.mxu0
        %v676 = vmax.f32 %v637, 0.0
        %v677 = vmax.f32 %v639, 0.0
        %v678 = vmax.f32 %v642, 0.0
        %v679 = vmax.f32 %v644, 0.0
        %v680 = vmax.f32 %v647, 0.0
        %v681 = vmax.f32 %v649, 0.0
        %v682 = vmax.f32 %v652, 0.0
        %v683 = vmax.f32 %v654, 0.0
        %v684 = vmax.f32 %v657, 0.0
        %v685 = vmax.f32 %v659, 0.0
        %v686 = vmax.f32 %v662, 0.0
        %v687 = vmax.f32 %v664, 0.0
        %v688 = vmax.f32 %v667, 0.0
        %v689 = vmax.f32 %v669, 0.0
        %v690 = vmax.f32 %v672, 0.0
        %v691 = vmax.f32 %v674, 0.0
        %v692 = vpack.c.bf16 %v677, %v676
        %v693 = vpack.c.bf16 %v679, %v678
        %v694 = vpack.c.bf16 %v681, %v680
        %v695 = vpack.c.bf16 %v683, %v682
        %v696 = vpack.c.bf16 %v685, %v684
        %v697 = vpack.c.bf16 %v687, %v686
        %v698 = vpack.c.bf16 %v689, %v688
        %v699 = vpack.c.bf16 %v691, %v690
        %v716 = vunpack.c.l.b16 %v388
        %v717 = vunpack.c.l.b16 %v389
        %v718 = vunpack.c.l.b16 %v390
        %v719 = vunpack.c.l.b16 %v391
        %v720 = vunpack.c.l.b16 %v392
        %v721 = vunpack.c.l.b16 %v393
        %v722 = vunpack.c.l.b16 %v394
        %v723 = vunpack.c.l.b16 %v395
        %v724 = vunpack.c.l.b16 %v396
        %v725 = vunpack.c.l.b16 %v397
        %v726 = vunpack.c.l.b16 %v398
        %v727 = vunpack.c.l.b16 %v399
        %v728 = vunpack.c.l.b16 %v400
        %v729 = vunpack.c.l.b16 %v401
        %v730 = vunpack.c.l.b16 %v402
        %v731 = vunpack.c.l.b16 %v403
        %v732 = vpack.c.b16 %v717, %v716
        %v733 = vpack.c.b16 %v719, %v718
        %v734 = vpack.c.b16 %v721, %v720
        %v735 = vpack.c.b16 %v723, %v722
        %v736 = vpack.c.b16 %v725, %v724
        %v737 = vpack.c.b16 %v727, %v726
        %v738 = vpack.c.b16 %v729, %v728
        %v739 = vpack.c.b16 %v731, %v730
        %748 = vmatpush.bf16.msra.mxu0 %v739
        %749 = vmatpush.bf16.msra.mxu0 %v738
        %750 = vmatpush.bf16.msra.mxu0 %v737
        %751 = vmatpush.bf16.msra.mxu0 %v736
        %752 = vmatpush.bf16.msra.mxu0 %v735
        %753 = vmatpush.bf16.msra.mxu0 %v734
        %754 = vmatpush.bf16.msra.mxu0 %v733
        %755 = vmatpush.bf16.msra.mxu0 %v732
        %756 = vmatmul.bf16.gmra.mxu0 %v692
        %v757 = vpop.f32.mrf.mxu0
        %v758 = vadd.f32 0.0, %v757
        %v759 = vpop.f32.mrf.mxu0
        %v760 = vadd.f32 0.0, %v759
        %761 = vmatmul.bf16.gmra.mxu0 %v693
        %v762 = vpop.f32.mrf.mxu0
        %v763 = vadd.f32 0.0, %v762
        %v764 = vpop.f32.mrf.mxu0
        %v765 = vadd.f32 0.0, %v764
        %766 = vmatmul.bf16.gmra.mxu0 %v694
        %v767 = vpop.f32.mrf.mxu0
        %v768 = vadd.f32 0.0, %v767
        %v769 = vpop.f32.mrf.mxu0
        %v770 = vadd.f32 0.0, %v769
        %771 = vmatmul.bf16.gmra.mxu0 %v695
        %v772 = vpop.f32.mrf.mxu0
        %v773 = vadd.f32 0.0, %v772
        %v774 = vpop.f32.mrf.mxu0
        %v775 = vadd.f32 0.0, %v774
        %776 = vmatmul.bf16.gmra.mxu0 %v696
        %v777 = vpop.f32.mrf.mxu0
        %v778 = vadd.f32 0.0, %v777
        %v779 = vpop.f32.mrf.mxu0
        %v780 = vadd.f32 0.0, %v779
        %781 = vmatmul.bf16.gmra.mxu0 %v697
        %v782 = vpop.f32.mrf.mxu0
        %v783 = vadd.f32 0.0, %v782
        %v784 = vpop.f32.mrf.mxu0
        %v785 = vadd.f32 0.0, %v784
        %786 = vmatmul.bf16.gmra.mxu0 %v698
        %v787 = vpop.f32.mrf.mxu0
        %v788 = vadd.f32 0.0, %v787
        %v789 = vpop.f32.mrf.mxu0
        %v790 = vadd.f32 0.0, %v789
        %791 = vmatmul.bf16.gmra.mxu0 %v699
        %v792 = vpop.f32.mrf.mxu0
        %v793 = vadd.f32 0.0, %v792
        %v794 = vpop.f32.mrf.mxu0
        %v795 = vadd.f32 0.0, %v794
        %796 = vdwg.mxu0
        %v797 = vpack.c.bf16 %v760, %v758
        %v798 = vpack.c.bf16 %v765, %v763
        %v799 = vpack.c.bf16 %v770, %v768
        %v800 = vpack.c.bf16 %v775, %v773
        %v801 = vpack.c.bf16 %v780, %v778
        %v802 = vpack.c.bf16 %v785, %v783
        %v803 = vpack.c.bf16 %v790, %v788
        %v804 = vpack.c.bf16 %v795, %v793
        %v806 = vperm.slane %v404, 0
        %v824 = vunpack.c.l.b16 %v356
        %v825 = vunpack.c.l.b16 %v357
        %v826 = vunpack.c.l.b16 %v358
        %v827 = vunpack.c.l.b16 %v359
        %v828 = vunpack.c.l.b16 %v360
        %v829 = vunpack.c.l.b16 %v361
        %v830 = vunpack.c.l.b16 %v362
        %v831 = vunpack.c.l.b16 %v363
        %v832 = vunpack.c.l.b16 %v364
        %v833 = vunpack.c.l.b16 %v365
        %v834 = vunpack.c.l.b16 %v366
        %v835 = vunpack.c.l.b16 %v367
        %v836 = vunpack.c.l.b16 %v368
        %v837 = vunpack.c.l.b16 %v369
        %v838 = vunpack.c.l.b16 %v370
        %v839 = vunpack.c.l.b16 %v371
        %v840 = vpack.c.b16 %v825, %v824
        %v841 = vpack.c.b16 %v827, %v826
        %v842 = vpack.c.b16 %v829, %v828
        %v843 = vpack.c.b16 %v831, %v830
        %v844 = vpack.c.b16 %v833, %v832
        %v845 = vpack.c.b16 %v835, %v834
        %v846 = vpack.c.b16 %v837, %v836
        %v847 = vpack.c.b16 %v839, %v838
        %856 = vmatpush.bf16.msra.mxu0 %v847
        %857 = vmatpush.bf16.msra.mxu0 %v846
        %858 = vmatpush.bf16.msra.mxu0 %v845
        %859 = vmatpush.bf16.msra.mxu0 %v844
        %860 = vmatpush.bf16.msra.mxu0 %v843
        %861 = vmatpush.bf16.msra.mxu0 %v842
        %862 = vmatpush.bf16.msra.mxu0 %v841
        %863 = vmatpush.bf16.msra.mxu0 %v840
        %864 = vmatmul.bf16.gmra.mxu0 %v503
        %v865 = vpop.f32.mrf.mxu0
        %v866 = vadd.f32 %v806, %v865
        %v867 = vpop.f32.mrf.mxu0
        %v868 = vadd.f32 %v806, %v867
        %869 = vmatmul.bf16.gmra.mxu0 %v504
        %v870 = vpop.f32.mrf.mxu0
        %v871 = vadd.f32 %v806, %v870
        %v872 = vpop.f32.mrf.mxu0
        %v873 = vadd.f32 %v806, %v872
        %874 = vmatmul.bf16.gmra.mxu0 %v505
        %v875 = vpop.f32.mrf.mxu0
        %v876 = vadd.f32 %v806, %v875
        %v877 = vpop.f32.mrf.mxu0
        %v878 = vadd.f32 %v806, %v877
        %879 = vmatmul.bf16.gmra.mxu0 %v506
        %v880 = vpop.f32.mrf.mxu0
        %v881 = vadd.f32 %v806, %v880
        %v882 = vpop.f32.mrf.mxu0
        %v883 = vadd.f32 %v806, %v882
        %884 = vmatmul.bf16.gmra.mxu0 %v507
        %v885 = vpop.f32.mrf.mxu0
        %v886 = vadd.f32 %v806, %v885
        %v887 = vpop.f32.mrf.mxu0
        %v888 = vadd.f32 %v806, %v887
        %889 = vmatmul.bf16.gmra.mxu0 %v508
        %v890 = vpop.f32.mrf.mxu0
        %v891 = vadd.f32 %v806, %v890
        %v892 = vpop.f32.mrf.mxu0
        %v893 = vadd.f32 %v806, %v892
        %894 = vmatmul.bf16.gmra.mxu0 %v509
        %v895 = vpop.f32.mrf.mxu0
        %v896 = vadd.f32 %v806, %v895
        %v897 = vpop.f32.mrf.mxu0
        %v898 = vadd.f32 %v806, %v897
        %899 = vmatmul.bf16.gmra.mxu0 %v510
        %v900 = vpop.f32.mrf.mxu0
        %v901 = vadd.f32 %v806, %v900
        %v902 = vpop.f32.mrf.mxu0
        %v903 = vadd.f32 %v806, %v902
        %904 = vdwg.mxu0
        %v906 = vperm.slane %v406, 0
        %908 = vmatpush.bf16.msra.mxu0 %v804
        %909 = vmatpush.bf16.msra.mxu0 %v803
        %910 = vmatpush.bf16.msra.mxu0 %v802
        %911 = vmatpush.bf16.msra.mxu0 %v801
        %912 = vmatpush.bf16.msra.mxu0 %v800
        %913 = vmatpush.bf16.msra.mxu0 %v799
        %914 = vmatpush.bf16.msra.mxu0 %v798
        %915 = vmatpush.bf16.msra.mxu0 %v797
        %916 = vmatmul.bf16.gmra.mxu0 %v455
        %v917 = vpop.f32.mrf.mxu0
        %v918 = vadd.f32 %v906, %v917
        %v919 = vpop.f32.mrf.mxu0
        %v920 = vadd.f32 %v906, %v919
        %921 = vmatmul.bf16.gmra.mxu0 %v456
        %v922 = vpop.f32.mrf.mxu0
        %v923 = vadd.f32 %v906, %v922
        %v924 = vpop.f32.mrf.mxu0
        %v925 = vadd.f32 %v906, %v924
        %926 = vmatmul.bf16.gmra.mxu0 %v457
        %v927 = vpop.f32.mrf.mxu0
        %v928 = vadd.f32 %v906, %v927
        %v929 = vpop.f32.mrf.mxu0
        %v930 = vadd.f32 %v906, %v929
        %931 = vmatmul.bf16.gmra.mxu0 %v458
        %v932 = vpop.f32.mrf.mxu0
        %v933 = vadd.f32 %v906, %v932
        %v934 = vpop.f32.mrf.mxu0
        %v935 = vadd.f32 %v906, %v934
        %936 = vmatmul.bf16.gmra.mxu0 %v459
        %v937 = vpop.f32.mrf.mxu0
        %v938 = vadd.f32 %v906, %v937
        %v939 = vpop.f32.mrf.mxu0
        %v940 = vadd.f32 %v906, %v939
        %941 = vmatmul.bf16.gmra.mxu0 %v460
        %v942 = vpop.f32.mrf.mxu0
        %v943 = vadd.f32 %v906, %v942
        %v944 = vpop.f32.mrf.mxu0
        %v945 = vadd.f32 %v906, %v944
        %946 = vmatmul.bf16.gmra.mxu0 %v461
        %v947 = vpop.f32.mrf.mxu0
        %v948 = vadd.f32 %v906, %v947
        %v949 = vpop.f32.mrf.mxu0
        %v950 = vadd.f32 %v906, %v949
        %951 = vmatmul.bf16.gmra.mxu0 %v462
        %v952 = vpop.f32.mrf.mxu0
        %v953 = vadd.f32 %v906, %v952
        %v954 = vpop.f32.mrf.mxu0
        %v955 = vadd.f32 %v906, %v954
        %956 = vdwg.mxu0
        %v957 = vadd.f32 %v918, %v866
        %v958 = vadd.f32 %v920, %v868
        %v959 = vadd.f32 %v923, %v871
        %v960 = vadd.f32 %v925, %v873
        %v961 = vadd.f32 %v928, %v876
        %v962 = vadd.f32 %v930, %v878
        %v963 = vadd.f32 %v933, %v881
        %v964 = vadd.f32 %v935, %v883
        %v965 = vadd.f32 %v938, %v886
        %v966 = vadd.f32 %v940, %v888
        %v967 = vadd.f32 %v943, %v891
        %v968 = vadd.f32 %v945, %v893
        %v969 = vadd.f32 %v948, %v896
        %v970 = vadd.f32 %v950, %v898
        %v971 = vadd.f32 %v953, %v901
        %v972 = vadd.f32 %v955, %v903
        %973 = vst [vmem:[%s339] sm:$0xff] %v957
        %974 = vst [vmem:[%s339 + $0x8] sm:$0xff] %v958
        %975 = vst [vmem:[%s339 + $0x10] sm:$0xff] %v959
        %976 = vst [vmem:[%s339 + $0x18] sm:$0xff] %v960
        %977 = vst [vmem:[%s339 + $0x20] sm:$0xff] %v961
        %978 = vst [vmem:[%s339 + $0x28] sm:$0xff] %v962
        %979 = vst [vmem:[%s339 + $0x30] sm:$0xff] %v963
        %980 = vst [vmem:[%s339 + $0x38] sm:$0xff] %v964
        %981 = vst [vmem:[%s339 + $0x40] sm:$0xff] %v965
        %982 = vst [vmem:[%s339 + $0x48] sm:$0xff] %v966
        %983 = vst [vmem:[%s339 + $0x50] sm:$0xff] %v967
        %984 = vst [vmem:[%s339 + $0x58] sm:$0xff] %v968
        %985 = vst [vmem:[%s339 + $0x60] sm:$0xff] %v969
        %986 = vst [vmem:[%s339 + $0x68] sm:$0xff] %v970
        %987 = vst [vmem:[%s339 + $0x70] sm:$0xff] %v971
        %988 = vst [vmem:[%s339 + $0x78] sm:$0xff] %v972
        %p989 = scmp.lt.s32.totalorder %s21, 1
        %s990 = scalar_select %p989, %s21, 1
        %s991 = smul.addr %s990, 16
        %s992 = smul.addr %s991, 8
        %s993 = scalar_lea.vmem %s8, %s992
        // Predicated region
        $region61: #{forward.1} parent=51 // pred_check
          %p994 = pneg %p212
        $region62: #{forward.1} parent=51 // pred_check_branch
          %996 = sbr.rel (%p994) target = $region64
        $region63: #{forward.1} parent=51 // pred_region
          _
        $region64: #{forward.1} parent=51 // pred_fallthru
          _
      $region52: #{forward.1} parent=5 // pred_fallthru
        _
      %p997 = scmp.le.s32.totalorder 2, %s16
      // Predicated region
      $region65: #{forward.1} parent=5 // pred_check
        %p998 = pneg %p997
      $region66: #{forward.1} parent=5 // pred_check_branch
        %1000 = sbr.rel (%p998) target = $region68
      $region67: #{forward.1} parent=5 // pred_region
        %s1001 = ssub.s32 %s16, 2
        // Predicated region
        $region69: #{forward.1} parent=67 // pred_check
          %p1002 = pneg %p218
        $region70: #{forward.1} parent=67 // pred_check_branch
          %1004 = sbr.rel (%p1002) target = $region72
        $region71: #{forward.1} parent=67 // pred_region
          %p1005 = scmp.lt.s32.totalorder %s22, 1
          %s1006 = scalar_select %p1005, %s22, 1
          %s1007 = smul.addr %s1006, 16
          %s1008 = smul.addr %s1007, 8
          %s1009 = scalar_lea.vmem %s8, %s1008
        $region72: #{forward.1} parent=67 // pred_fallthru
          _
      $region68: #{forward.1} parent=5 // pred_fallthru
        _
    $region6: #{forward.1} parent=1 // loop_footer
      %s20 = sadd.s32 1, %s16
    $region7: #{forward.1} parent=1 // loop_footer_branch
      %15 = sbr.rel target = $region3
    $region8: #{forward.1} parent=1 // loop_exit
      _
    %1010 = vsyncpa [#allocation3], 1
    %s1011 = scalar_lea.sflag [#allocation3], 1
    %1012 = vsyncpa %s1011, 1
    %1013 = vsyncpa [#allocation5], 1

</llo_original>
